<compile_context>
chip_gen: v7x
topology: tpu7x:2x2x1
jax: 0.10.0
libtpu: 0.0.40
codegen_flags: <defaults>
</compile_context>

<pallas_src>
import functools

import jax
import jax.numpy as jnp
from jax import lax
from jax.experimental import pallas as pl
from jax.experimental.pallas import tpu as pltpu

_LANES = 128
_SUBLANES = 8
_SMALL_INPUT_ELEMS = 1 << 18   # below this plain XLA beats kernel fixed cost


def _round_up(x, m):
    return ((x + m - 1) // m) * m


def _chip_config():
    """Return (num_partials, max_block_rows, vmem_limit_bytes, core_parallel)."""
    try:
        kind = jax.devices()[0].device_kind.lower()
    except Exception:
        kind = ""
    if "v7" in kind or "7x" in kind:
        # 2 TensorCores/chip, 64 MiB VMEM per TC, ~3.2 TB/s HBM: large blocks
        # (4 MiB f32 per input per buffer) with explicit headroom.
        return 2, 8192, 48 * 1024 * 1024, True
    # v5e / v6e: single TensorCore, 128 MiB physical VMEM; raise the scoped
    # VMEM limit past the 16/32 MiB defaults so 4096-row blocks fit.
    return 1, 4096, 64 * 1024 * 1024, False


def _mse_partial_kernel(yt_ref, yp_ref, o_ref, acc_ref, *, n_rows):
    p = pl.program_id(0)
    j = pl.program_id(1)
    steps = pl.num_programs(1)
    block_rows = yt_ref.shape[0]

    @pl.when(j == 0)
    def _():
        acc_ref[...] = jnp.zeros_like(acc_ref)

    d = yt_ref[...].astype(jnp.float32) - yp_ref[...].astype(jnp.float32)
    dd = d * d

    row_start = (p * steps + j) * block_rows
    # Tail of the row range, or a fully clamped out-of-range block.
    is_ragged = row_start + block_rows > n_rows

    @pl.when(jnp.logical_not(is_ragged))
    def _():
        # Cross-vreg VALU add tree into the single-vreg accumulator (no XLU,
        # no block-shaped scratch traffic).
        acc_ref[...] += dd.reshape(block_rows // 8, 8, _LANES).sum(axis=0)

    @pl.when(is_ragged)
    def _():
        local = lax.broadcasted_iota(jnp.int32, (block_rows, 1), 0)
        valid = (row_start + local) < n_rows
        masked = jnp.where(valid, dd, 0.0)  # mask before accumulation
        acc_ref[...] += masked.reshape(block_rows // 8, 8, _LANES).sum(axis=0)

    @pl.when(j == steps - 1)
    def _():
        o_ref[...] = acc_ref[...].reshape(1, _SUBLANES, _LANES)


def parametric_loss(y_true, y_pred, *, force_pallas=False):
    """Pallas equivalent of ParametricLoss.forward: mean squared error."""
    assert y_true.shape == y_pred.shape, "y_true / y_pred must match in shape"
    n_elements = int(y_true.size)
    assert n_elements > 0

    n_full_rows = n_elements // _LANES
    n_body = n_full_rows * _LANES

    # Small-input fast path: fixed kernel cost dominates below ~256K elements.
    if (n_elements < _SMALL_INPUT_ELEMS and not force_pallas) or n_full_rows == 0:
        d = y_true.astype(jnp.float32) - y_pred.astype(jnp.float32)
        return jnp.mean(d * d)

    num_partials, max_block_rows, vmem_limit, core_parallel = _chip_config()

    yt = jnp.ravel(y_true)
    yp = jnp.ravel(y_pred)

    # Lane-dense body view.  When n % 128 == 0 this is a free bitcast; when it
    # is not, only the prefix is materialised (no jnp.pad rewrite of BOTH full
    # inputs) and the <128-element tail is summed with plain jnp below.
    if n_body != n_elements:
        yt_body = yt[:n_body]
        yp_body = yp[:n_body]
    else:
        yt_body, yp_body = yt, yp
    yt2d = yt_body.reshape(n_full_rows, _LANES)
    yp2d = yp_body.reshape(n_full_rows, _LANES)

    # Sublane multiple required by the narrower dtype (f32->8, bf16->16, i8->32).
    min_itemsize = min(jnp.dtype(yt2d.dtype).itemsize,
                       jnp.dtype(yp2d.dtype).itemsize)
    sub = max(_SUBLANES, 32 // max(1, int(min_itemsize)))

    # Largest block that still splits rows across the partial axis.
    target = min(max_block_rows, pl.cdiv(n_full_rows, num_partials))
    block_rows = _round_up(target, sub)
    n_blocks = pl.cdiv(n_full_rows, block_rows)
    steps = pl.cdiv(n_blocks, num_partials)

    def in_index_map(p_idx, j_idx):
        # Clamp out-of-range (p, j) steps onto the last valid block; their rows
        # are fully masked inside the kernel.
        return (jnp.minimum(p_idx * steps + j_idx, n_blocks - 1), 0)

    kernel = functools.partial(_mse_partial_kernel, n_rows=n_full_rows)

    dim_sem = ((pltpu.CORE_PARALLEL if core_parallel else pltpu.ARBITRARY),
               pltpu.ARBITRARY)

    partials = pl.pallas_call(
        kernel,
        out_shape=jax.ShapeDtypeStruct((num_partials, _SUBLANES, _LANES),
                                       jnp.float32),
        grid_spec=pltpu.PrefetchScalarGridSpec(
            num_scalar_prefetch=0,
            grid=(num_partials, steps),
            in_specs=[
                pl.BlockSpec((block_rows, _LANES), in_index_map),
                pl.BlockSpec((block_rows, _LANES), in_index_map),
            ],
            out_specs=pl.BlockSpec((1, _SUBLANES, _LANES),
                                   lambda p_idx, j_idx: (p_idx, 0, 0)),
            scratch_shapes=[pltpu.VMEM((_SUBLANES, _LANES), jnp.float32)],
        ),
        compiler_params=pltpu.CompilerParams(
            dimension_semantics=dim_sem,
            vmem_limit_bytes=vmem_limit,
        ),
    )(yt2d, yp2d)

    total = jnp.sum(partials)  # tiny (P, 8, 128) reduce, trivial in XLA

    if n_body != n_elements:
        dt = yt[n_body:].astype(jnp.float32) - yp[n_body:].astype(jnp.float32)
        total = total + jnp.sum(dt * dt)

    # Multiply by a host-side double-precision reciprocal so n > 2^24 does not
    # lose bits to an f32 rounding of the element count.
    return total * (1.0 / float(n_elements))


if __name__ == "__main__":
    key = jax.random.PRNGKey(0)

    def _check(shape, k, force_pallas):
        k1, k2 = jax.random.split(k)
        y_true = jax.random.normal(k1, shape, dtype=jnp.float32)
        y_pred = jax.random.normal(k2, shape, dtype=jnp.float32)
        loss = jax.block_until_ready(
            parametric_loss(y_true, y_pred, force_pallas=force_pallas))
        ref = jnp.mean((y_true - y_pred) ** 2)
        assert jnp.allclose(loss, ref, rtol=1e-4, atol=1e-6), (shape, loss, ref)
        return loss

    k0, k1, k2, k3 = jax.random.split(key, 4)
    # Primary small NCHW-like example (kernel path forced so it is exercised).
    _check((2, 4, 16, 16), k0, True)
    # Multi-block path, > 256K elements: kernel path taken naturally.
    _check((10, 8, 80, 100), k1, False)
    # Ragged lane tail (n % 128 != 0): prefix through kernel + jnp tail.
    _check((7, 9, 53, 61), k2, True)
    # Small-input fast path (plain jnp).
    _check((2, 4, 16, 16), k3, False)

    print("KERNEL_OK")
</pallas_src>

<mosaic_0001>
module attributes {stable_mosaic.version = 11 : i64} {
  func.func @_mse_partial_kernel(%arg0: i32, %arg1: i32, %arg2: memref<16x128xf32, #tpu.memory_space<vmem>>, %arg3: memref<16x128xf32, #tpu.memory_space<vmem>>, %arg4: memref<1x8x128xf32, #tpu.memory_space<vmem>>, %arg5: memref<8x128xf32, #tpu.memory_space<vmem>>) attributes {dimension_semantics = [#tpu.dimension_semantics<arbitrary>, #tpu.dimension_semantics<arbitrary>], iteration_bounds = array<i64: 1, 1>, scalar_prefetch = 0 : i64, scratch_operands = 1 : i64, tpu.core_type = #tpu.core_type<tc>, window_params = [{transform_indices = @transform_0, window_bounds = array<i64: 16, 128>}, {transform_indices = @transform_1, window_bounds = array<i64: 16, 128>}, {transform_indices = @transform_2, window_bounds = array<i64: 1, 8, 128>}]} {
    %c0_i32 = arith.constant 0 : i32
    %0 = arith.cmpi eq, %arg1, %c0_i32 : i32
    %1 = arith.extui %0 : i1 to i32
    %c0_i32_0 = arith.constant 0 : i32
    %2 = arith.cmpi ne, %1, %c0_i32_0 : i32
    scf.if %2 {
      %cst = arith.constant 0.000000e+00 : f32
      %20 = vector.broadcast %cst : f32 to vector<8x128xf32>
      %c0_10 = arith.constant 0 : index
      %c0_11 = arith.constant 0 : index
      %21 = vector.load %arg5[%c0_10, %c0_11] : memref<8x128xf32, #tpu.memory_space<vmem>>, vector<8x128xf32>
      tpu.vector_store %arg5[%c0_10, %c0_11], %20 {strides = array<i32>} : memref<8x128xf32, #tpu.memory_space<vmem>>, vector<8x128xf32>,
    } else {
    }
    %c0 = arith.constant 0 : index
    %c0_1 = arith.constant 0 : index
    %3 = vector.load %arg2[%c0, %c0_1] : memref<16x128xf32, #tpu.memory_space<vmem>>, vector<16x128xf32>
    %c0_2 = arith.constant 0 : index
    %c0_3 = arith.constant 0 : index
    %4 = vector.load %arg3[%c0_2, %c0_3] : memref<16x128xf32, #tpu.memory_space<vmem>>, vector<16x128xf32>
    %5 = arith.subf %3, %4 : vector<16x128xf32>
    %6 = arith.mulf %5, %5 : vector<16x128xf32>
    %c1_i32 = arith.constant 1 : i32
    %7 = arith.muli %arg0, %c1_i32 : i32
    %8 = arith.addi %7, %arg1 : i32
    %c16_i32 = arith.constant 16 : i32
    %9 = arith.muli %8, %c16_i32 : i32
    %c16_i32_4 = arith.constant 16 : i32
    %10 = arith.addi %9, %c16_i32_4 : i32
    %c16_i32_5 = arith.constant 16 : i32
    %11 = arith.cmpi sgt, %10, %c16_i32_5 : i32
    %true = arith.constant true
    %12 = arith.xori %11, %true : i1
    %13 = arith.extui %12 : i1 to i32
    %c0_i32_6 = arith.constant 0 : i32
    %14 = arith.cmpi ne, %13, %c0_i32_6 : i32
    scf.if %14 {
      %c0_10 = arith.constant 0 : index
      %c0_11 = arith.constant 0 : index
      %20 = vector.load %arg5[%c0_10, %c0_11] : memref<8x128xf32, #tpu.memory_space<vmem>>, vector<8x128xf32>
      %21 = vector.shape_cast %6 : vector<16x128xf32> to vector<2x8x128xf32>
      %cst = arith.constant dense<0.000000e+00> : vector<8x128xf32>
      %22 = vector.multi_reduction <add>, %21, %cst [0] : vector<2x8x128xf32> to vector<8x128xf32>
      %23 = arith.addf %20, %22 : vector<8x128xf32>
      %c0_12 = arith.constant 0 : index
      %c0_13 = arith.constant 0 : index
      %24 = vector.load %arg5[%c0_12, %c0_13] : memref<8x128xf32, #tpu.memory_space<vmem>>, vector<8x128xf32>
      tpu.vector_store %arg5[%c0_12, %c0_13], %23 {strides = array<i32>} : memref<8x128xf32, #tpu.memory_space<vmem>>, vector<8x128xf32>,
    } else {
    }
    %15 = arith.extui %11 : i1 to i32
    %c0_i32_7 = arith.constant 0 : i32
    %16 = arith.cmpi ne, %15, %c0_i32_7 : i32
    scf.if %16 {
      %20 = tpu.iota {dimensions = array<i32: 0>} : vector<16x1xi32>
      %21 = vector.broadcast %9 : i32 to vector<16x1xi32>
      %22 = arith.addi %21, %20 : vector<16x1xi32>
      %c16_i32_10 = arith.constant 16 : i32
      %23 = vector.broadcast %c16_i32_10 : i32 to vector<16x1xi32>
      %24 = arith.cmpi slt, %22, %23 : vector<16x1xi32>
      %cst = arith.constant 0.000000e+00 : f32
      %25 = vector.shape_cast %24 : vector<16x1xi1> to vector<16x1xi1>
      %26 = vector.broadcast %25 : vector<16x1xi1> to vector<16x128xi1>
      %27 = vector.broadcast %cst : f32 to vector<16x128xf32>
      %28 = arith.select %26, %6, %27 : vector<16x128xi1>, vector<16x128xf32>
      %c0_11 = arith.constant 0 : index
      %c0_12 = arith.constant 0 : index
      %29 = vector.load %arg5[%c0_11, %c0_12] : memref<8x128xf32, #tpu.memory_space<vmem>>, vector<8x128xf32>
      %30 = vector.shape_cast %28 : vector<16x128xf32> to vector<2x8x128xf32>
      %cst_13 = arith.constant dense<0.000000e+00> : vector<8x128xf32>
      %31 = vector.multi_reduction <add>, %30, %cst_13 [0] : vector<2x8x128xf32> to vector<8x128xf32>
      %32 = arith.addf %29, %31 : vector<8x128xf32>
      %c0_14 = arith.constant 0 : index
      %c0_15 = arith.constant 0 : index
      %33 = vector.load %arg5[%c0_14, %c0_15] : memref<8x128xf32, #tpu.memory_space<vmem>>, vector<8x128xf32>
      tpu.vector_store %arg5[%c0_14, %c0_15], %32 {strides = array<i32>} : memref<8x128xf32, #tpu.memory_space<vmem>>, vector<8x128xf32>,
    } else {
    }
    %c0_i32_8 = arith.constant 0 : i32
    %17 = arith.cmpi eq, %arg1, %c0_i32_8 : i32
    %18 = arith.extui %17 : i1 to i32
    %c0_i32_9 = arith.constant 0 : i32
    %19 = arith.cmpi ne, %18, %c0_i32_9 : i32
    scf.if %19 {
      %c0_10 = arith.constant 0 : index
      %c0_11 = arith.constant 0 : index
      %20 = vector.load %arg5[%c0_10, %c0_11] : memref<8x128xf32, #tpu.memory_space<vmem>>, vector<8x128xf32>
      %21 = vector.shape_cast %20 : vector<8x128xf32> to vector<1x8x128xf32>
      %c0_12 = arith.constant 0 : index
      %c0_13 = arith.constant 0 : index
      %c0_14 = arith.constant 0 : index
      %22 = vector.load %arg4[%c0_12, %c0_13, %c0_14] : memref<1x8x128xf32, #tpu.memory_space<vmem>>, vector<1x8x128xf32>
      tpu.vector_store %arg4[%c0_12, %c0_13, %c0_14], %21 {strides = array<i32>} : memref<1x8x128xf32, #tpu.memory_space<vmem>>, vector<1x8x128xf32>,
    } else {
    }
    return
  }
  func.func @transform_0(%arg0: i32, %arg1: i32) -> (i32, i32) {
    %c1_i32 = arith.constant 1 : i32
    %0 = arith.muli %arg0, %c1_i32 : i32
    %1 = arith.addi %0, %arg1 : i32
    %c0_i32 = arith.constant 0 : i32
    %2 = arith.minsi %1, %c0_i32 : i32
    %c0_i32_0 = arith.constant 0 : i32
    %c0_i32_1 = arith.constant 0 : i32
    return %2, %c0_i32_0 : i32, i32
  }
  func.func @transform_1(%arg0: i32, %arg1: i32) -> (i32, i32) {
    %c1_i32 = arith.constant 1 : i32
    %0 = arith.muli %arg0, %c1_i32 : i32
    %1 = arith.addi %0, %arg1 : i32
    %c0_i32 = arith.constant 0 : i32
    %2 = arith.minsi %1, %c0_i32 : i32
    %c0_i32_0 = arith.constant 0 : i32
    %c0_i32_1 = arith.constant 0 : i32
    return %2, %c0_i32_0 : i32, i32
  }
  func.func @transform_2(%arg0: i32, %arg1: i32) -> (i32, i32, i32) {
    %c0_i32 = arith.constant 0 : i32
    %c0_i32_0 = arith.constant 0 : i32
    %c0_i32_1 = arith.constant 0 : i32
    return %arg0, %c0_i32, %c0_i32_0 : i32, i32, i32
  }
}

</mosaic_0001>

<llo_original>
// kernel: tpu_custom_call.1
$region0: #{tpu_custom_call.1}
  #allocation0 [shape = 'u32[]', space=smem, size = 0x4, offset = 0x4, fixed_abs, tag = 'smem constant byte address 0x4 - core index']
  #allocation1 [shape = 'u32[144,128]{1,0:T(1,128)}', space=vmem, size = 0x12000, scoped, tag = 'internal scratch']
  #allocation2 [shape = 'f32[8,128]{1,0:T(8,128)}', space=vmem, size = 0x1000, scoped, tag = 'scratch operand']
  %s0 = inlined_call_operand.hbm [shape: f32[16,128], index: 0, kind: input, shape index: {}]
  %s1 = inlined_call_operand.hbm [shape: f32[16,128], index: 1, kind: input, shape index: {}]
  %s2 = inlined_call_operand.hbm [shape: f32[1,8,128], index: 2, kind: output, shape index: {}]
  %s3 = sld [smem:[#allocation0]]
  $region42: #{tpu_custom_call.1} parent=0
    _
  %s5 = ssub.s32 1, %s3
  %s6 = scalar_select 0, %s5, %s3
  $region1: #{tpu_custom_call.1} parent=0
    #allocation3 [shape = 'u8[8192]{0}', space=vmem, size = 0x2000, scoped, tag = 'input window, operand 0, single buffered']
    #allocation4 [shape = 's32[1]{0}', space=sflag, size = 0x4, scoped, tag = 'scoped memory for tpu_custom_call.1']
    #allocation5 [shape = 's32[1]{0}', space=sflag, size = 0x4, scoped, tag = 'scoped memory for tpu_custom_call.1']
    #allocation6 [shape = 'u8[8192]{0}', space=vmem, size = 0x2000, scoped, tag = 'input window, operand 1, single buffered']
    #allocation7 [shape = 's32[1]{0}', space=sflag, size = 0x4, scoped, tag = 'scoped memory for tpu_custom_call.1']
    #allocation8 [shape = 'u8[4096]{0}', space=vmem, size = 0x1000, scoped, tag = 'output window, operand 0, single buffered']
    %7 = vsyncpa [#allocation4], 0
    %8 = vsyncpa [#allocation7], 0
    %9 = vsyncpa [#allocation5], 0
    // Predicated region
    $region2: #{tpu_custom_call.1} parent=1 // pred_check
      _
    $region3: #{tpu_custom_call.1} parent=1 // pred_check_branch
      %11 = sbr.rel (0) target = $region5
    $region4: #{tpu_custom_call.1} parent=1 // pred_region
      %s12 = sadd.s32 0, 0
      %p13 = scmp.lt.s32.totalorder %s12, 0
      %s14 = scalar_select %p13, %s12, 0
      %s15 = smul.u32 2, %s14
      %s17 = ssub.s32 256, 256
      %18 = vsyncadd [#allocation4], %s17
      %s19 = smul.addr %s15, 128
      %s20 = scalar_lea.hbm %s0, %s19
      %s21 = sshll.u32 [#allocation3], 4
      %s22 = int_to_ptr.vmem [resolvable:$true] %s21
      %27 = dma.hbm_to_vmem [thread:$0]  %s20, 256, %s22, [#allocation4], 128, 128, 8
    $region5: #{tpu_custom_call.1} parent=1 // pred_fallthru
      _
    // Predicated region
    $region6: #{tpu_custom_call.1} parent=1 // pred_check
      _
    $region7: #{tpu_custom_call.1} parent=1 // pred_check_branch
      %29 = sbr.rel (0) target = $region9
    $region8: #{tpu_custom_call.1} parent=1 // pred_region
      %s30 = sadd.s32 0, 0
      %p31 = scmp.lt.s32.totalorder %s30, 0
      %s32 = scalar_select %p31, %s30, 0
      %s33 = smul.u32 2, %s32
      %s35 = ssub.s32 256, 256
      %36 = vsyncadd [#allocation7], %s35
      %s37 = smul.addr %s33, 128
      %s38 = scalar_lea.hbm %s1, %s37
      %s39 = sshll.u32 [#allocation6], 4
      %s40 = int_to_ptr.vmem [resolvable:$true] %s39
      %45 = dma.hbm_to_vmem [thread:$0]  %s38, 256, %s40, [#allocation7], 128, 128, 8
    $region9: #{tpu_custom_call.1} parent=1 // pred_fallthru
      _
    // Predicated region
    $region10: #{tpu_custom_call.1} parent=1 // pred_check
      _
    $region11: #{tpu_custom_call.1} parent=1 // pred_check_branch
      %47 = sbr.rel (0) target = $region13
    $region12: #{tpu_custom_call.1} parent=1 // pred_region
      %48 = dma.done [#allocation4], 256
    $region13: #{tpu_custom_call.1} parent=1 // pred_fallthru
      _
    // Predicated region
    $region14: #{tpu_custom_call.1} parent=1 // pred_check
      _
    $region15: #{tpu_custom_call.1} parent=1 // pred_check_branch
      %50 = sbr.rel (0) target = $region17
    $region16: #{tpu_custom_call.1} parent=1 // pred_region
      %51 = dma.done [#allocation7], 256
    $region17: #{tpu_custom_call.1} parent=1 // pred_fallthru
      _
    %s52 = sadd.s32 0, 0
    %p53 = scmp.lt.s32.totalorder %s52, 0
    %s54 = scalar_select %p53, %s52, 0
    %s55 = smul.u32 2, %s54
    %s56 = sadd.s32 0, 0
    %p57 = scmp.lt.s32.totalorder %s56, 0
    %s58 = scalar_select %p57, %s56, 0
    %s59 = smul.u32 2, %s58
    %p60 = scmp.eq.s32.totalorder 0, 0
    // Predicated region
    $region18: #{tpu_custom_call.1} parent=1 // pred_check
      %p61 = pneg %p60
    $region19: #{tpu_custom_call.1} parent=1 // pred_check_branch
      %63 = sbr.rel (%p61) target = $region21
    $region20: #{tpu_custom_call.1} parent=1 // pred_region
      %64 = vst [vmem:[#allocation2] sm:$0xff] 0.0
    $region21: #{tpu_custom_call.1} parent=1 // pred_fallthru
      _
    %v65 = vld [vmem:[#allocation3] sm:$0xff]
    %v66 = vld [vmem:[#allocation3 + $0x8] sm:$0xff]
    %v67 = vld [vmem:[#allocation6] sm:$0xff]
    %v68 = vld [vmem:[#allocation6 + $0x8] sm:$0xff]
    %v69 = vsub.f32 %v65, %v67
    %v70 = vsub.f32 %v66, %v68
    %v71 = vmul.f32 %v69, %v69
    %v72 = vmul.f32 %v70, %v70
    %s73 = sadd.s32 0, 0
    %s74 = smul.u32 %s73, 16
    %s75 = sadd.s32 %s74, 16
    %p76 = scmp.gt.s32.totalorder %s75, 16
    %p77 = scmp.le.s32.totalorder %s75, 16
    // Predicated region
    $region22: #{tpu_custom_call.1} parent=1 // pred_check
      %p78 = pneg %p77
    $region23: #{tpu_custom_call.1} parent=1 // pred_check_branch
      %80 = sbr.rel (%p78) target = $region25
    $region24: #{tpu_custom_call.1} parent=1 // pred_region
      %v81 = vld [vmem:[#allocation2] sm:$0xff]
      %v82 = vadd.f32 %v71, %v72
      %v83 = vadd.f32 %v81, %v82
      %84 = vst [vmem:[#allocation2] sm:$0xff] %v83
    $region25: #{tpu_custom_call.1} parent=1 // pred_fallthru
      _
    // Predicated region
    $region26: #{tpu_custom_call.1} parent=1 // pred_check
      %p85 = pneg %p76
    $region27: #{tpu_custom_call.1} parent=1 // pred_check_branch
      %87 = sbr.rel (%p85) target = $region29
    $region28: #{tpu_custom_call.1} parent=1 // pred_region
      %v88 = vlaneseq
      %v89 = vshrl.u32 %v88, 7
      %v90 = vadd.s32 %v89, 8
      %v91 = vstv %s74
      %v92 = vadd.s32 %v91, %v89
      %v93 = vadd.s32 %v91, %v90
      %vm94 = vcmp.lt.s32.totalorder %v92, 16
      %vm95 = vcmp.lt.s32.totalorder %v93, 16
      %v96 = vsel %vm94, 1, 0
      %v97 = vsel %vm95, 1, 0
      %vm98 = vcmp.eq.s32.totalorder %v96, 1
      %vm99 = vcmp.eq.s32.totalorder %v97, 1
      %v100 = vsel %vm98, %v71, 0.0
      %v101 = vsel %vm99, %v72, 0.0
      %v102 = vld [vmem:[#allocation2] sm:$0xff]
      %v103 = vadd.f32 %v100, %v101
      %v104 = vadd.f32 %v102, %v103
      %105 = vst [vmem:[#allocation2] sm:$0xff] %v104
    $region29: #{tpu_custom_call.1} parent=1 // pred_fallthru
      _
    // Predicated region
    $region30: #{tpu_custom_call.1} parent=1 // pred_check
      %p106 = pneg %p60
    $region31: #{tpu_custom_call.1} parent=1 // pred_check_branch
      %108 = sbr.rel (%p106) target = $region33
    $region32: #{tpu_custom_call.1} parent=1 // pred_region
      %v109 = vld [vmem:[#allocation2] sm:$0xff]
      %110 = vst [vmem:[#allocation8] sm:$0xff] %v109
    $region33: #{tpu_custom_call.1} parent=1 // pred_fallthru
      _
    // Predicated region
    $region34: #{tpu_custom_call.1} parent=1 // pred_check
      _
    $region35: #{tpu_custom_call.1} parent=1 // pred_check_branch
      %112 = sbr.rel (0) target = $region37
    $region36: #{tpu_custom_call.1} parent=1 // pred_region
      %s114 = ssub.s32 128, 128
      %115 = vsyncadd [#allocation5], %s114
      %s117 = sshll.u32 [#allocation8], 4
      %s118 = int_to_ptr.vmem [resolvable:$true] %s117
      %120 = dma.vmem_to_hbm [thread:$0]  %s118, 128, %s2, [#allocation5]
    $region37: #{tpu_custom_call.1} parent=1 // pred_fallthru
      _
    // Predicated region
    $region38: #{tpu_custom_call.1} parent=1 // pred_check
      _
    $region39: #{tpu_custom_call.1} parent=1 // pred_check_branch
      %122 = sbr.rel (0) target = $region41
    $region40: #{tpu_custom_call.1} parent=1 // pred_region
      %123 = dma.done [#allocation5], 128
    $region41: #{tpu_custom_call.1} parent=1 // pred_fallthru
      _
    %124 = vsyncpa [#allocation4], 1
    %125 = vsyncpa [#allocation7], 1
    %126 = vsyncpa [#allocation5], 1

</llo_original>
